<compile_context>
chip_gen: v6e
topology: v6e:2x2x1
jax: 0.10.0
libtpu: 0.0.40
codegen_flags: <defaults>
</compile_context>

<pallas_src>
import functools

import jax
import jax.numpy as jnp
from jax.experimental import pallas as pl
from jax.experimental.pallas import tpu as pltpu


def _text_lstm_kernel(x_ref, h0_ref, c0_ref, wih_ref, whh_ref, bias_ref,
                      w_ref, b_ref, out_ref, *, batch, seq, n_hidden):
    """Single-invocation TextLSTM forward.

    x_ref   : (batch*seq, n_class)   batch-major flatten of X (no transpose)
    h0_ref  : (batch, n_hidden)
    c0_ref  : (batch, n_hidden)
    wih_ref : (n_class, 4*n_hidden)  = weight_ih.T, PyTorch gate order [i,f,g,o]
    whh_ref : (n_hidden, 4*n_hidden) = weight_hh.T
    bias_ref: (1, 4*n_hidden)        = bias_ih + bias_hh
    w_ref   : (n_hidden, n_class)
    b_ref   : (1, n_class)
    out_ref : (batch, n_class)
    """
    four_h = 4 * n_hidden

    # --- Phase 1: hoist the input projection out of the recurrence. --------
    # One (batch*seq, n_class) @ (n_class, 4H) matmul instead of `seq` tiny ones.
    gx = (jnp.dot(x_ref[...], wih_ref[...],
                  preferred_element_type=jnp.float32)
          + bias_ref[...])                              # (batch*seq, 4H)
    # Sublane-only split of the leading axis; relayout-free.
    gx3 = gx.reshape(batch, seq, four_h)

    whh = whh_ref[...]                                  # hoisted load
    h = h0_ref[...].astype(jnp.float32)
    c = c0_ref[...].astype(jnp.float32)

    # --- Phase 2: serial recurrence (only h @ W_hh^T on the critical chain).
    # `seq` is compile-time known and small -> full trace-time unroll; static
    # slices of gx3 are free (no dynamic indexing, no scratch round-trip).
    for t in range(seq):
        gates = gx3[:, t, :] + jnp.dot(h, whh,
                                       preferred_element_type=jnp.float32)
        # Full-width activations (2 EUP pushes), then gate quarters.
        sg = jax.nn.sigmoid(gates)
        tg = jnp.tanh(gates)
        i_g = sg[:, 0 * n_hidden:1 * n_hidden]
        f_g = sg[:, 1 * n_hidden:2 * n_hidden]
        g_g = tg[:, 2 * n_hidden:3 * n_hidden]
        o_g = sg[:, 3 * n_hidden:4 * n_hidden]
        c = f_g * c + i_g * g_g
        h = o_g * jnp.tanh(c)

    # --- Phase 3: output projection: h_T @ W + b. ---------------------------
    out_ref[...] = (jnp.dot(h, w_ref[...],
                            preferred_element_type=jnp.float32)
                    + b_ref[...]).astype(out_ref.dtype)


def text_lstm_forward(hidden_and_cell, X, params):
    """hidden_and_cell = (h0, c0), each (1, batch, n_hidden).
       X: (batch, seq, n_class).  Returns (batch, n_class)."""
    h0, c0 = hidden_and_cell
    batch, seq, n_class = X.shape
    n_hidden = h0.shape[-1]

    # Free (metadata-only) reshape; no wrapper-side transpose / HBM copy.
    x2d = X.reshape(batch * seq, n_class)
    h0_2d = h0[0]                                       # (batch, n_hidden)
    c0_2d = c0[0]

    wih_t = params["weight_ih"].T                       # (n_class, 4*n_hidden)
    whh_t = params["weight_hh"].T                       # (n_hidden, 4*n_hidden)
    bias = (params["bias_ih"] + params["bias_hh"]).reshape(1, 4 * n_hidden)
    W = params["W"]                                     # (n_hidden, n_class)
    b = params["b"].reshape(1, n_class)

    kernel = functools.partial(_text_lstm_kernel,
                               batch=batch, seq=seq, n_hidden=n_hidden)
    vmem_spec = pl.BlockSpec(memory_space=pltpu.MemorySpace.VMEM)
    out = pl.pallas_call(
        kernel,
        out_shape=jax.ShapeDtypeStruct((batch, n_class), X.dtype),
        in_specs=[vmem_spec] * 8,
        out_specs=vmem_spec,
    )(x2d, h0_2d, c0_2d, wih_t, whh_t, bias, W, b)
    return out


def _reference_forward(hidden_and_cell, X, params):
    """Pure-JAX reference (PyTorch LSTM semantics) for sanity checking."""
    h, c = hidden_and_cell
    h, c = h[0], c[0]
    n_hidden = h.shape[-1]
    x_tm = jnp.transpose(X, (1, 0, 2))
    wih, whh = params["weight_ih"], params["weight_hh"]
    bih, bhh = params["bias_ih"], params["bias_hh"]

    def step(carry, x_t):
        h, c = carry
        gates = x_t @ wih.T + bih + h @ whh.T + bhh
        i = jax.nn.sigmoid(gates[:, 0 * n_hidden:1 * n_hidden])
        f = jax.nn.sigmoid(gates[:, 1 * n_hidden:2 * n_hidden])
        g = jnp.tanh(gates[:, 2 * n_hidden:3 * n_hidden])
        o = jax.nn.sigmoid(gates[:, 3 * n_hidden:4 * n_hidden])
        c = f * c + i * g
        h = o * jnp.tanh(c)
        return (h, c), None

    (h, c), _ = jax.lax.scan(step, (h, c), x_tm)
    return h @ params["W"] + params["b"]


if __name__ == "__main__":
    # Small shapes consistent with the module's forward.
    batch, seq, n_class, n_hidden = 2, 8, 16, 32
    dtype = jnp.float32

    key = jax.random.PRNGKey(0)
    keys = jax.random.split(key, 9)

    params = {
        "weight_ih": jax.random.normal(keys[0], (4 * n_hidden, n_class), dtype) * 0.1,
        "weight_hh": jax.random.normal(keys[1], (4 * n_hidden, n_hidden), dtype) * 0.1,
        "bias_ih": jax.random.normal(keys[2], (4 * n_hidden,), dtype) * 0.1,
        "bias_hh": jax.random.normal(keys[3], (4 * n_hidden,), dtype) * 0.1,
        "W": jax.random.normal(keys[4], (n_hidden, n_class), dtype),
        "b": jax.random.normal(keys[5], (n_class,), dtype),
    }

    X = jax.random.normal(keys[6], (batch, seq, n_class), dtype)
    h0 = jax.random.normal(keys[7], (1, batch, n_hidden), dtype)
    c0 = jax.random.normal(keys[8], (1, batch, n_hidden), dtype)

    out = text_lstm_forward((h0, c0), X, params)
    out = jax.block_until_ready(out)

    ref = _reference_forward((h0, c0), X, params)
    assert out.shape == (batch, n_class)
    assert jnp.allclose(out, ref, atol=1e-4, rtol=1e-4), "mismatch vs reference"

    print("KERNEL_OK")
</pallas_src>

<mosaic_0001>
module attributes {stable_mosaic.version = 11 : i64} {
  func.func @_text_lstm_kernel(%arg0: memref<16x16xf32, #tpu.memory_space<vmem>>, %arg1: memref<2x32xf32, #tpu.memory_space<vmem>>, %arg2: memref<2x32xf32, #tpu.memory_space<vmem>>, %arg3: memref<16x128xf32, #tpu.memory_space<vmem>>, %arg4: memref<32x128xf32, #tpu.memory_space<vmem>>, %arg5: memref<1x128xf32, #tpu.memory_space<vmem>>, %arg6: memref<32x16xf32, #tpu.memory_space<vmem>>, %arg7: memref<1x16xf32, #tpu.memory_space<vmem>>, %arg8: memref<2x16xf32, #tpu.memory_space<vmem>>) attributes {dimension_semantics = [], scalar_prefetch = 0 : i64, scratch_operands = 0 : i64, tpu.core_type = #tpu.core_type<tc>} {
    %c0 = arith.constant 0 : index
    %c0_0 = arith.constant 0 : index
    %0 = vector.load %arg0[%c0, %c0_0] : memref<16x16xf32, #tpu.memory_space<vmem>>, vector<16x16xf32>
    %c0_1 = arith.constant 0 : index
    %c0_2 = arith.constant 0 : index
    %1 = vector.load %arg3[%c0_1, %c0_2] : memref<16x128xf32, #tpu.memory_space<vmem>>, vector<16x128xf32>
    %cst = arith.constant dense<0.000000e+00> : vector<16x128xf32>
    %2 = tpu.matmul %0, %1, %cst {dimension_numbers = #tpu.dot_dimension_numbers<[1], [0], [0], [1], [0, 0, 1, 1], [], []>} : vector<16x16xf32>, vector<16x128xf32>, vector<16x128xf32> -> vector<16x128xf32>
    %c0_3 = arith.constant 0 : index
    %c0_4 = arith.constant 0 : index
    %3 = vector.load %arg5[%c0_3, %c0_4] : memref<1x128xf32, #tpu.memory_space<vmem>>, vector<1x128xf32>
    %4 = vector.broadcast %3 : vector<1x128xf32> to vector<16x128xf32>
    %5 = arith.addf %2, %4 : vector<16x128xf32>
    %6 = vector.shape_cast %5 : vector<16x128xf32> to vector<2x8x128xf32>
    %c0_5 = arith.constant 0 : index
    %c0_6 = arith.constant 0 : index
    %7 = vector.load %arg4[%c0_5, %c0_6] : memref<32x128xf32, #tpu.memory_space<vmem>>, vector<32x128xf32>
    %c0_7 = arith.constant 0 : index
    %c0_8 = arith.constant 0 : index
    %8 = vector.load %arg1[%c0_7, %c0_8] : memref<2x32xf32, #tpu.memory_space<vmem>>, vector<2x32xf32>
    %c0_9 = arith.constant 0 : index
    %c0_10 = arith.constant 0 : index
    %9 = vector.load %arg2[%c0_9, %c0_10] : memref<2x32xf32, #tpu.memory_space<vmem>>, vector<2x32xf32>
    %10 = vector.extract_strided_slice %6 {offsets = [0, 0, 0], sizes = [2, 1, 128], strides = [1, 1, 1]} : vector<2x8x128xf32> to vector<2x1x128xf32>
    %11 = vector.shape_cast %10 : vector<2x1x128xf32> to vector<2x128xf32>
    %cst_11 = arith.constant dense<0.000000e+00> : vector<2x128xf32>
    %12 = tpu.matmul %8, %7, %cst_11 {dimension_numbers = #tpu.dot_dimension_numbers<[1], [0], [0], [1], [0, 0, 1, 1], [], []>} : vector<2x32xf32>, vector<32x128xf32>, vector<2x128xf32> -> vector<2x128xf32>
    %13 = arith.addf %11, %12 : vector<2x128xf32>
    %14 = arith.negf %13 : vector<2x128xf32>
    %15 = math.exp %14 : vector<2x128xf32>
    %cst_12 = arith.constant 1.000000e+00 : f32
    %16 = vector.broadcast %cst_12 : f32 to vector<2x128xf32>
    %17 = arith.addf %16, %15 : vector<2x128xf32>
    %18 = arith.divf %16, %17 : vector<2x128xf32>
    %19 = math.tanh %13 : vector<2x128xf32>
    %20 = vector.extract_strided_slice %18 {offsets = [0, 0], sizes = [2, 32], strides = [1, 1]} : vector<2x128xf32> to vector<2x32xf32>
    %21 = vector.extract_strided_slice %18 {offsets = [0, 32], sizes = [2, 32], strides = [1, 1]} : vector<2x128xf32> to vector<2x32xf32>
    %22 = vector.extract_strided_slice %19 {offsets = [0, 64], sizes = [2, 32], strides = [1, 1]} : vector<2x128xf32> to vector<2x32xf32>
    %23 = vector.extract_strided_slice %18 {offsets = [0, 96], sizes = [2, 32], strides = [1, 1]} : vector<2x128xf32> to vector<2x32xf32>
    %24 = arith.mulf %21, %9 : vector<2x32xf32>
    %25 = arith.mulf %20, %22 : vector<2x32xf32>
    %26 = arith.addf %24, %25 : vector<2x32xf32>
    %27 = math.tanh %26 : vector<2x32xf32>
    %28 = arith.mulf %23, %27 : vector<2x32xf32>
    %29 = vector.extract_strided_slice %6 {offsets = [0, 1, 0], sizes = [2, 1, 128], strides = [1, 1, 1]} : vector<2x8x128xf32> to vector<2x1x128xf32>
    %30 = vector.shape_cast %29 : vector<2x1x128xf32> to vector<2x128xf32>
    %cst_13 = arith.constant dense<0.000000e+00> : vector<2x128xf32>
    %31 = tpu.matmul %28, %7, %cst_13 {dimension_numbers = #tpu.dot_dimension_numbers<[1], [0], [0], [1], [0, 0, 1, 1], [], []>} : vector<2x32xf32>, vector<32x128xf32>, vector<2x128xf32> -> vector<2x128xf32>
    %32 = arith.addf %30, %31 : vector<2x128xf32>
    %33 = arith.negf %32 : vector<2x128xf32>
    %34 = math.exp %33 : vector<2x128xf32>
    %cst_14 = arith.constant 1.000000e+00 : f32
    %35 = vector.broadcast %cst_14 : f32 to vector<2x128xf32>
    %36 = arith.addf %35, %34 : vector<2x128xf32>
    %37 = arith.divf %35, %36 : vector<2x128xf32>
    %38 = math.tanh %32 : vector<2x128xf32>
    %39 = vector.extract_strided_slice %37 {offsets = [0, 0], sizes = [2, 32], strides = [1, 1]} : vector<2x128xf32> to vector<2x32xf32>
    %40 = vector.extract_strided_slice %37 {offsets = [0, 32], sizes = [2, 32], strides = [1, 1]} : vector<2x128xf32> to vector<2x32xf32>
    %41 = vector.extract_strided_slice %38 {offsets = [0, 64], sizes = [2, 32], strides = [1, 1]} : vector<2x128xf32> to vector<2x32xf32>
    %42 = vector.extract_strided_slice %37 {offsets = [0, 96], sizes = [2, 32], strides = [1, 1]} : vector<2x128xf32> to vector<2x32xf32>
    %43 = arith.mulf %40, %26 : vector<2x32xf32>
    %44 = arith.mulf %39, %41 : vector<2x32xf32>
    %45 = arith.addf %43, %44 : vector<2x32xf32>
    %46 = math.tanh %45 : vector<2x32xf32>
    %47 = arith.mulf %42, %46 : vector<2x32xf32>
    %48 = vector.extract_strided_slice %6 {offsets = [0, 2, 0], sizes = [2, 1, 128], strides = [1, 1, 1]} : vector<2x8x128xf32> to vector<2x1x128xf32>
    %49 = vector.shape_cast %48 : vector<2x1x128xf32> to vector<2x128xf32>
    %cst_15 = arith.constant dense<0.000000e+00> : vector<2x128xf32>
    %50 = tpu.matmul %47, %7, %cst_15 {dimension_numbers = #tpu.dot_dimension_numbers<[1], [0], [0], [1], [0, 0, 1, 1], [], []>} : vector<2x32xf32>, vector<32x128xf32>, vector<2x128xf32> -> vector<2x128xf32>
    %51 = arith.addf %49, %50 : vector<2x128xf32>
    %52 = arith.negf %51 : vector<2x128xf32>
    %53 = math.exp %52 : vector<2x128xf32>
    %cst_16 = arith.constant 1.000000e+00 : f32
    %54 = vector.broadcast %cst_16 : f32 to vector<2x128xf32>
    %55 = arith.addf %54, %53 : vector<2x128xf32>
    %56 = arith.divf %54, %55 : vector<2x128xf32>
    %57 = math.tanh %51 : vector<2x128xf32>
    %58 = vector.extract_strided_slice %56 {offsets = [0, 0], sizes = [2, 32], strides = [1, 1]} : vector<2x128xf32> to vector<2x32xf32>
    %59 = vector.extract_strided_slice %56 {offsets = [0, 32], sizes = [2, 32], strides = [1, 1]} : vector<2x128xf32> to vector<2x32xf32>
    %60 = vector.extract_strided_slice %57 {offsets = [0, 64], sizes = [2, 32], strides = [1, 1]} : vector<2x128xf32> to vector<2x32xf32>
    %61 = vector.extract_strided_slice %56 {offsets = [0, 96], sizes = [2, 32], strides = [1, 1]} : vector<2x128xf32> to vector<2x32xf32>
    %62 = arith.mulf %59, %45 : vector<2x32xf32>
    %63 = arith.mulf %58, %60 : vector<2x32xf32>
    %64 = arith.addf %62, %63 : vector<2x32xf32>
    %65 = math.tanh %64 : vector<2x32xf32>
    %66 = arith.mulf %61, %65 : vector<2x32xf32>
    %67 = vector.extract_strided_slice %6 {offsets = [0, 3, 0], sizes = [2, 1, 128], strides = [1, 1, 1]} : vector<2x8x128xf32> to vector<2x1x128xf32>
    %68 = vector.shape_cast %67 : vector<2x1x128xf32> to vector<2x128xf32>
    %cst_17 = arith.constant dense<0.000000e+00> : vector<2x128xf32>
    %69 = tpu.matmul %66, %7, %cst_17 {dimension_numbers = #tpu.dot_dimension_numbers<[1], [0], [0], [1], [0, 0, 1, 1], [], []>} : vector<2x32xf32>, vector<32x128xf32>, vector<2x128xf32> -> vector<2x128xf32>
    %70 = arith.addf %68, %69 : vector<2x128xf32>
    %71 = arith.negf %70 : vector<2x128xf32>
    %72 = math.exp %71 : vector<2x128xf32>
    %cst_18 = arith.constant 1.000000e+00 : f32
    %73 = vector.broadcast %cst_18 : f32 to vector<2x128xf32>
    %74 = arith.addf %73, %72 : vector<2x128xf32>
    %75 = arith.divf %73, %74 : vector<2x128xf32>
    %76 = math.tanh %70 : vector<2x128xf32>
    %77 = vector.extract_strided_slice %75 {offsets = [0, 0], sizes = [2, 32], strides = [1, 1]} : vector<2x128xf32> to vector<2x32xf32>
    %78 = vector.extract_strided_slice %75 {offsets = [0, 32], sizes = [2, 32], strides = [1, 1]} : vector<2x128xf32> to vector<2x32xf32>
    %79 = vector.extract_strided_slice %76 {offsets = [0, 64], sizes = [2, 32], strides = [1, 1]} : vector<2x128xf32> to vector<2x32xf32>
    %80 = vector.extract_strided_slice %75 {offsets = [0, 96], sizes = [2, 32], strides = [1, 1]} : vector<2x128xf32> to vector<2x32xf32>
    %81 = arith.mulf %78, %64 : vector<2x32xf32>
    %82 = arith.mulf %77, %79 : vector<2x32xf32>
    %83 = arith.addf %81, %82 : vector<2x32xf32>
    %84 = math.tanh %83 : vector<2x32xf32>
    %85 = arith.mulf %80, %84 : vector<2x32xf32>
    %86 = vector.extract_strided_slice %6 {offsets = [0, 4, 0], sizes = [2, 1, 128], strides = [1, 1, 1]} : vector<2x8x128xf32> to vector<2x1x128xf32>
    %87 = vector.shape_cast %86 : vector<2x1x128xf32> to vector<2x128xf32>
    %cst_19 = arith.constant dense<0.000000e+00> : vector<2x128xf32>
    %88 = tpu.matmul %85, %7, %cst_19 {dimension_numbers = #tpu.dot_dimension_numbers<[1], [0], [0], [1], [0, 0, 1, 1], [], []>} : vector<2x32xf32>, vector<32x128xf32>, vector<2x128xf32> -> vector<2x128xf32>
    %89 = arith.addf %87, %88 : vector<2x128xf32>
    %90 = arith.negf %89 : vector<2x128xf32>
    %91 = math.exp %90 : vector<2x128xf32>
    %cst_20 = arith.constant 1.000000e+00 : f32
    %92 = vector.broadcast %cst_20 : f32 to vector<2x128xf32>
    %93 = arith.addf %92, %91 : vector<2x128xf32>
    %94 = arith.divf %92, %93 : vector<2x128xf32>
    %95 = math.tanh %89 : vector<2x128xf32>
    %96 = vector.extract_strided_slice %94 {offsets = [0, 0], sizes = [2, 32], strides = [1, 1]} : vector<2x128xf32> to vector<2x32xf32>
    %97 = vector.extract_strided_slice %94 {offsets = [0, 32], sizes = [2, 32], strides = [1, 1]} : vector<2x128xf32> to vector<2x32xf32>
    %98 = vector.extract_strided_slice %95 {offsets = [0, 64], sizes = [2, 32], strides = [1, 1]} : vector<2x128xf32> to vector<2x32xf32>
    %99 = vector.extract_strided_slice %94 {offsets = [0, 96], sizes = [2, 32], strides = [1, 1]} : vector<2x128xf32> to vector<2x32xf32>
    %100 = arith.mulf %97, %83 : vector<2x32xf32>
    %101 = arith.mulf %96, %98 : vector<2x32xf32>
    %102 = arith.addf %100, %101 : vector<2x32xf32>
    %103 = math.tanh %102 : vector<2x32xf32>
    %104 = arith.mulf %99, %103 : vector<2x32xf32>
    %105 = vector.extract_strided_slice %6 {offsets = [0, 5, 0], sizes = [2, 1, 128], strides = [1, 1, 1]} : vector<2x8x128xf32> to vector<2x1x128xf32>
    %106 = vector.shape_cast %105 : vector<2x1x128xf32> to vector<2x128xf32>
    %cst_21 = arith.constant dense<0.000000e+00> : vector<2x128xf32>
    %107 = tpu.matmul %104, %7, %cst_21 {dimension_numbers = #tpu.dot_dimension_numbers<[1], [0], [0], [1], [0, 0, 1, 1], [], []>} : vector<2x32xf32>, vector<32x128xf32>, vector<2x128xf32> -> vector<2x128xf32>
    %108 = arith.addf %106, %107 : vector<2x128xf32>
    %109 = arith.negf %108 : vector<2x128xf32>
    %110 = math.exp %109 : vector<2x128xf32>
    %cst_22 = arith.constant 1.000000e+00 : f32
    %111 = vector.broadcast %cst_22 : f32 to vector<2x128xf32>
    %112 = arith.addf %111, %110 : vector<2x128xf32>
    %113 = arith.divf %111, %112 : vector<2x128xf32>
    %114 = math.tanh %108 : vector<2x128xf32>
    %115 = vector.extract_strided_slice %113 {offsets = [0, 0], sizes = [2, 32], strides = [1, 1]} : vector<2x128xf32> to vector<2x32xf32>
    %116 = vector.extract_strided_slice %113 {offsets = [0, 32], sizes = [2, 32], strides = [1, 1]} : vector<2x128xf32> to vector<2x32xf32>
    %117 = vector.extract_strided_slice %114 {offsets = [0, 64], sizes = [2, 32], strides = [1, 1]} : vector<2x128xf32> to vector<2x32xf32>
    %118 = vector.extract_strided_slice %113 {offsets = [0, 96], sizes = [2, 32], strides = [1, 1]} : vector<2x128xf32> to vector<2x32xf32>
    %119 = arith.mulf %116, %102 : vector<2x32xf32>
    %120 = arith.mulf %115, %117 : vector<2x32xf32>
    %121 = arith.addf %119, %120 : vector<2x32xf32>
    %122 = math.tanh %121 : vector<2x32xf32>
    %123 = arith.mulf %118, %122 : vector<2x32xf32>
    %124 = vector.extract_strided_slice %6 {offsets = [0, 6, 0], sizes = [2, 1, 128], strides = [1, 1, 1]} : vector<2x8x128xf32> to vector<2x1x128xf32>
    %125 = vector.shape_cast %124 : vector<2x1x128xf32> to vector<2x128xf32>
    %cst_23 = arith.constant dense<0.000000e+00> : vector<2x128xf32>
    %126 = tpu.matmul %123, %7, %cst_23 {dimension_numbers = #tpu.dot_dimension_numbers<[1], [0], [0], [1], [0, 0, 1, 1], [], []>} : vector<2x32xf32>, vector<32x128xf32>, vector<2x128xf32> -> vector<2x128xf32>
    %127 = arith.addf %125, %126 : vector<2x128xf32>
    %128 = arith.negf %127 : vector<2x128xf32>
    %129 = math.exp %128 : vector<2x128xf32>
    %cst_24 = arith.constant 1.000000e+00 : f32
    %130 = vector.broadcast %cst_24 : f32 to vector<2x128xf32>
    %131 = arith.addf %130, %129 : vector<2x128xf32>
    %132 = arith.divf %130, %131 : vector<2x128xf32>
    %133 = math.tanh %127 : vector<2x128xf32>
    %134 = vector.extract_strided_slice %132 {offsets = [0, 0], sizes = [2, 32], strides = [1, 1]} : vector<2x128xf32> to vector<2x32xf32>
    %135 = vector.extract_strided_slice %132 {offsets = [0, 32], sizes = [2, 32], strides = [1, 1]} : vector<2x128xf32> to vector<2x32xf32>
    %136 = vector.extract_strided_slice %133 {offsets = [0, 64], sizes = [2, 32], strides = [1, 1]} : vector<2x128xf32> to vector<2x32xf32>
    %137 = vector.extract_strided_slice %132 {offsets = [0, 96], sizes = [2, 32], strides = [1, 1]} : vector<2x128xf32> to vector<2x32xf32>
    %138 = arith.mulf %135, %121 : vector<2x32xf32>
    %139 = arith.mulf %134, %136 : vector<2x32xf32>
    %140 = arith.addf %138, %139 : vector<2x32xf32>
    %141 = math.tanh %140 : vector<2x32xf32>
    %142 = arith.mulf %137, %141 : vector<2x32xf32>
    %143 = vector.extract_strided_slice %6 {offsets = [0, 7, 0], sizes = [2, 1, 128], strides = [1, 1, 1]} : vector<2x8x128xf32> to vector<2x1x128xf32>
    %144 = vector.shape_cast %143 : vector<2x1x128xf32> to vector<2x128xf32>
    %cst_25 = arith.constant dense<0.000000e+00> : vector<2x128xf32>
    %145 = tpu.matmul %142, %7, %cst_25 {dimension_numbers = #tpu.dot_dimension_numbers<[1], [0], [0], [1], [0, 0, 1, 1], [], []>} : vector<2x32xf32>, vector<32x128xf32>, vector<2x128xf32> -> vector<2x128xf32>
    %146 = arith.addf %144, %145 : vector<2x128xf32>
    %147 = arith.negf %146 : vector<2x128xf32>
    %148 = math.exp %147 : vector<2x128xf32>
    %cst_26 = arith.constant 1.000000e+00 : f32
    %149 = vector.broadcast %cst_26 : f32 to vector<2x128xf32>
    %150 = arith.addf %149, %148 : vector<2x128xf32>
    %151 = arith.divf %149, %150 : vector<2x128xf32>
    %152 = math.tanh %146 : vector<2x128xf32>
    %153 = vector.extract_strided_slice %151 {offsets = [0, 0], sizes = [2, 32], strides = [1, 1]} : vector<2x128xf32> to vector<2x32xf32>
    %154 = vector.extract_strided_slice %151 {offsets = [0, 32], sizes = [2, 32], strides = [1, 1]} : vector<2x128xf32> to vector<2x32xf32>
    %155 = vector.extract_strided_slice %152 {offsets = [0, 64], sizes = [2, 32], strides = [1, 1]} : vector<2x128xf32> to vector<2x32xf32>
    %156 = vector.extract_strided_slice %151 {offsets = [0, 96], sizes = [2, 32], strides = [1, 1]} : vector<2x128xf32> to vector<2x32xf32>
    %157 = arith.mulf %154, %140 : vector<2x32xf32>
    %158 = arith.mulf %153, %155 : vector<2x32xf32>
    %159 = arith.addf %157, %158 : vector<2x32xf32>
    %160 = math.tanh %159 : vector<2x32xf32>
    %161 = arith.mulf %156, %160 : vector<2x32xf32>
    %c0_27 = arith.constant 0 : index
    %c0_28 = arith.constant 0 : index
    %162 = vector.load %arg6[%c0_27, %c0_28] : memref<32x16xf32, #tpu.memory_space<vmem>>, vector<32x16xf32>
    %cst_29 = arith.constant dense<0.000000e+00> : vector<2x16xf32>
    %163 = tpu.matmul %161, %162, %cst_29 {dimension_numbers = #tpu.dot_dimension_numbers<[1], [0], [0], [1], [0, 0, 1, 1], [], []>} : vector<2x32xf32>, vector<32x16xf32>, vector<2x16xf32> -> vector<2x16xf32>
    %c0_30 = arith.constant 0 : index
    %c0_31 = arith.constant 0 : index
    %164 = vector.load %arg7[%c0_30, %c0_31] : memref<1x16xf32, #tpu.memory_space<vmem>>, vector<1x16xf32>
    %165 = vector.broadcast %164 : vector<1x16xf32> to vector<2x16xf32>
    %166 = arith.addf %163, %165 : vector<2x16xf32>
    %c0_32 = arith.constant 0 : index
    %c0_33 = arith.constant 0 : index
    %167 = vector.load %arg8[%c0_32, %c0_33] : memref<2x16xf32, #tpu.memory_space<vmem>>, vector<2x16xf32>
    tpu.vector_store %arg8[%c0_32, %c0_33], %166 {strides = array<i32>} : memref<2x16xf32, #tpu.memory_space<vmem>>, vector<2x16xf32>,
    return
  }
}

</mosaic_0001>

<llo_original>
// kernel: tpu_custom_call.1
$region0: #{tpu_custom_call.1}
  #allocation0 [shape = 'u32[]', space=smem, size = 0x4, offset = 0x4, fixed_abs, tag = 'smem constant byte address 0x4 - core index']
  #allocation1 [shape = 'u32[144,128]{1,0:T(1,128)}', space=vmem, size = 0x12000, scoped, tag = 'internal scratch']
  %s0 = inlined_call_operand.vmem [shape: f32[16,16], index: 0, kind: input, shape index: {}]
  %s1 = inlined_call_operand.vmem [shape: f32[2,32], index: 1, kind: input, shape index: {}]
  %s2 = inlined_call_operand.vmem [shape: f32[2,32], index: 2, kind: input, shape index: {}]
  %s3 = inlined_call_operand.hbm [shape: f32[16,128], index: 3, kind: input, shape index: {}]
  %s4 = inlined_call_operand.vmem [shape: f32[32,128], index: 4, kind: input, shape index: {}]
  %s5 = inlined_call_operand.vmem [shape: f32[1,128], index: 5, kind: input, shape index: {}]
  %s6 = inlined_call_operand.vmem [shape: f32[32,16], index: 6, kind: input, shape index: {}]
  %s7 = inlined_call_operand.vmem [shape: f32[1,16], index: 7, kind: input, shape index: {}]
  %s8 = inlined_call_operand.hbm [shape: f32[2,16], index: 8, kind: output, shape index: {}]
  %s9 = sld [smem:[#allocation0]]
  $region46: #{tpu_custom_call.1} parent=0
    _
  %s11 = ssub.s32 1, %s9
  %s12 = scalar_select 0, %s11, %s9
  $region1: #{tpu_custom_call.1} parent=0
    #allocation2 [shape = 'u8[8192]{0}', space=vmem, size = 0x2000, scoped, tag = 'input window, operand 3, single buffered']
    #allocation3 [shape = 's32[1]{0}', space=sflag, size = 0x4, scoped, tag = 'scoped memory for tpu_custom_call.1']
    #allocation4 [shape = 's32[1]{0}', space=sflag, size = 0x4, scoped, tag = 'scoped memory for tpu_custom_call.1']
    #allocation5 [shape = 'u8[1024]{0}', space=vmem, size = 0x400, scoped, tag = 'output window, operand 0, single buffered']
    %13 = vsyncpa [#allocation3], 0
    %14 = vsyncpa [#allocation4], 0
    // Predicated region
    $region2: #{tpu_custom_call.1} parent=1 // pred_check
      _
    $region3: #{tpu_custom_call.1} parent=1 // pred_check_branch
      %16 = sbr.rel (0) target = $region5
    $region4: #{tpu_custom_call.1} parent=1 // pred_region
      _
    $region5: #{tpu_custom_call.1} parent=1 // pred_fallthru
      _
    // Predicated region
    $region6: #{tpu_custom_call.1} parent=1 // pred_check
      _
    $region7: #{tpu_custom_call.1} parent=1 // pred_check_branch
      %18 = sbr.rel (0) target = $region9
    $region8: #{tpu_custom_call.1} parent=1 // pred_region
      _
    $region9: #{tpu_custom_call.1} parent=1 // pred_fallthru
      _
    // Predicated region
    $region10: #{tpu_custom_call.1} parent=1 // pred_check
      _
    $region11: #{tpu_custom_call.1} parent=1 // pred_check_branch
      %20 = sbr.rel (0) target = $region13
    $region12: #{tpu_custom_call.1} parent=1 // pred_region
      _
    $region13: #{tpu_custom_call.1} parent=1 // pred_fallthru
      _
    // Predicated region
    $region14: #{tpu_custom_call.1} parent=1 // pred_check
      _
    $region15: #{tpu_custom_call.1} parent=1 // pred_check_branch
      %22 = sbr.rel (0) target = $region17
    $region16: #{tpu_custom_call.1} parent=1 // pred_region
      %s24 = ssub.s32 256, 256
      %25 = vsyncadd [#allocation3], %s24
      %s26 = sshll.u32 [#allocation2], 4
      %s27 = int_to_ptr.vmem [resolvable:$true] %s26
      %32 = dma.hbm_to_vmem [thread:$0]  %s3, 256, %s27, [#allocation3], 128, 128, 8
    $region17: #{tpu_custom_call.1} parent=1 // pred_fallthru
      _
    // Predicated region
    $region18: #{tpu_custom_call.1} parent=1 // pred_check
      _
    $region19: #{tpu_custom_call.1} parent=1 // pred_check_branch
      %34 = sbr.rel (0) target = $region21
    $region20: #{tpu_custom_call.1} parent=1 // pred_region
      _
    $region21: #{tpu_custom_call.1} parent=1 // pred_fallthru
      _
    // Predicated region
    $region22: #{tpu_custom_call.1} parent=1 // pred_check
      _
    $region23: #{tpu_custom_call.1} parent=1 // pred_check_branch
      %36 = sbr.rel (0) target = $region25
    $region24: #{tpu_custom_call.1} parent=1 // pred_region
      _
    $region25: #{tpu_custom_call.1} parent=1 // pred_fallthru
      _
    // Predicated region
    $region26: #{tpu_custom_call.1} parent=1 // pred_check
      _
    $region27: #{tpu_custom_call.1} parent=1 // pred_check_branch
      %38 = sbr.rel (0) target = $region29
    $region28: #{tpu_custom_call.1} parent=1 // pred_region
      _
    $region29: #{tpu_custom_call.1} parent=1 // pred_fallthru
      _
    // Predicated region
    $region30: #{tpu_custom_call.1} parent=1 // pred_check
      _
    $region31: #{tpu_custom_call.1} parent=1 // pred_check_branch
      %40 = sbr.rel (0) target = $region33
    $region32: #{tpu_custom_call.1} parent=1 // pred_region
      _
    $region33: #{tpu_custom_call.1} parent=1 // pred_fallthru
      _
    // Predicated region
    $region34: #{tpu_custom_call.1} parent=1 // pred_check
      _
    $region35: #{tpu_custom_call.1} parent=1 // pred_check_branch
      %42 = sbr.rel (0) target = $region37
    $region36: #{tpu_custom_call.1} parent=1 // pred_region
      %43 = dma.done [#allocation3], 256
    $region37: #{tpu_custom_call.1} parent=1 // pred_fallthru
      _
    %v44 = vld [vmem:[%s0] sm:$0xff]
    %v45 = vld [vmem:[%s0 + $0x8] sm:$0xff]
    %v46 = vld [vmem:[#allocation2] sm:$0xff]
    %v47 = vld [vmem:[#allocation2 + $0x8] sm:$0xff]
    %v48 = vld [vmem:[%s5] sm:$0x1]
    %v50 = vlaneseq
    %v51 = vshrl.u32 %v50, 7
    %v52 = vsub.s32 0, %v51
    %v53 = vrot.slane %v48, %v52
    %vm55 = vcmask 130048
    %v57 = vsel %vm55, %v44, 0
    %v60 = vsel %vm55, %v45, 0
    %62 = vmatprep.subr.mxu0 0.0
    %63 = vmatpush1.msra.mxu0 0.0
    %64 = vmatprep.subr.mxu0 0.0
    %65 = vmatpush1.msra.mxu0 0.0
    %66 = vmatprep.subr.mxu0 0.0
    %67 = vmatpush1.msra.mxu0 0.0
    %68 = vmatprep.subr.mxu0 0.0
    %69 = vmatpush1.msra.mxu0 0.0
    %70 = vmatprep.subr.mxu0 0.0
    %71 = vmatpush1.msra.mxu0 0.0
    %72 = vmatprep.subr.mxu0 0.0
    %73 = vmatpush1.msra.mxu0 0.0
    %74 = vmatprep.subr.mxu0 0.0
    %75 = vmatpush1.msra.mxu0 0.0
    %76 = vmatprep.subr.mxu0 0.0
    %77 = vmatpush1.msra.mxu0 0.0
    %78 = vmatprep.subr.mxu0 0.0
    %79 = vmatpush1.msra.mxu0 0.0
    %80 = vmatprep.subr.mxu0 0.0
    %81 = vmatpush1.msra.mxu0 0.0
    %82 = vmatprep.subr.mxu0 0.0
    %83 = vmatpush1.msra.mxu0 0.0
    %84 = vmatprep.subr.mxu0 0.0
    %85 = vmatpush1.msra.mxu0 0.0
    %86 = vmatprep.subr.mxu0 0.0
    %87 = vmatpush1.msra.mxu0 0.0
    %88 = vmatprep.subr.mxu0 0.0
    %89 = vmatpush1.msra.mxu0 0.0
    %90 = vmatprep.subr.mxu0 0.0
    %91 = vmatpush1.msra.mxu0 %v47
    %92 = vmatprep.subr.mxu0 0.0
    %93 = vmatpush1.msra.mxu0 %v46
    %94 = vmatprep.subr.mxu0 0.0
    %95 = vmatpush2.msra.mxu0 0.0
    %96 = vmatprep.subr.mxu0 0.0
    %97 = vmatpush2.msra.mxu0 0.0
    %98 = vmatprep.subr.mxu0 0.0
    %99 = vmatpush2.msra.mxu0 0.0
    %100 = vmatprep.subr.mxu0 0.0
    %101 = vmatpush2.msra.mxu0 0.0
    %102 = vmatprep.subr.mxu0 0.0
    %103 = vmatpush2.msra.mxu0 0.0
    %104 = vmatprep.subr.mxu0 0.0
    %105 = vmatpush2.msra.mxu0 0.0
    %106 = vmatprep.subr.mxu0 0.0
    %107 = vmatpush2.msra.mxu0 0.0
    %108 = vmatprep.subr.mxu0 0.0
    %109 = vmatpush2.msra.mxu0 0.0
    %110 = vmatprep.subr.mxu0 0.0
    %111 = vmatpush2.msra.mxu0 0.0
    %112 = vmatprep.subr.mxu0 0.0
    %113 = vmatpush2.msra.mxu0 0.0
    %114 = vmatprep.subr.mxu0 0.0
    %115 = vmatpush2.msra.mxu0 0.0
    %116 = vmatprep.subr.mxu0 0.0
    %117 = vmatpush2.msra.mxu0 0.0
    %118 = vmatprep.subr.mxu0 0.0
    %119 = vmatpush2.msra.mxu0 0.0
    %120 = vmatprep.subr.mxu0 0.0
    %121 = vmatpush2.msra.mxu0 0.0
    %122 = vmatprep.subr.mxu0 0.0
    %123 = vmatpush2.msra.mxu0 0.0
    %124 = vmatprep.subr.mxu0 0.0
    %125 = vmatpush2.msra.mxu0 0.0
    %126 = vmatprep.mubr.f32.mxu0 0.0
    %127 = vmatmul.mubr.f32.gmra.mxu0 %v57
    %v128 = vpop.f32.mrf.mxu0
    %v129 = vadd.f32 %v53, %v128
    %v130 = vpop.f32.mrf.mxu0
    %131 = vmatprep.mubr.f32.mxu0 0.0
    %132 = vmatmul.mubr.f32.gmra.mxu0 %v60
    %v133 = vpop.f32.mrf.mxu0
    %v134 = vadd.f32 %v53, %v133
    %v135 = vpop.f32.mrf.mxu0
    %136 = vdwg.mxu0
    %v137 = vld [vmem:[%s4] sm:$0xff]
    %v138 = vld [vmem:[%s4 + $0x8] sm:$0xff]
    %v139 = vld [vmem:[%s4 + $0x10] sm:$0xff]
    %v140 = vld [vmem:[%s4 + $0x18] sm:$0xff]
    %v141 = vld [vmem:[%s1] sm:$0x3]
    %v142 = vld [vmem:[%s2] sm:$0x3]
    %vm143 = vcmask 261120
    %v145 = vsel %vm143, %v141, 0
    %147 = vmatprep.subr.mxu0 0.0
    %148 = vmatpush1.msra.mxu0 0.0
    %149 = vmatprep.subr.mxu0 0.0
    %150 = vmatpush1.msra.mxu0 0.0
    %151 = vmatprep.subr.mxu0 0.0
    %152 = vmatpush1.msra.mxu0 0.0
    %153 = vmatprep.subr.mxu0 0.0
    %154 = vmatpush1.msra.mxu0 0.0
    %155 = vmatprep.subr.mxu0 0.0
    %156 = vmatpush1.msra.mxu0 0.0
    %157 = vmatprep.subr.mxu0 0.0
    %158 = vmatpush1.msra.mxu0 0.0
    %159 = vmatprep.subr.mxu0 0.0
    %160 = vmatpush1.msra.mxu0 0.0
    %161 = vmatprep.subr.mxu0 0.0
    %162 = vmatpush1.msra.mxu0 0.0
    %163 = vmatprep.subr.mxu0 0.0
    %164 = vmatpush1.msra.mxu0 0.0
    %165 = vmatprep.subr.mxu0 0.0
    %166 = vmatpush1.msra.mxu0 0.0
    %167 = vmatprep.subr.mxu0 0.0
    %168 = vmatpush1.msra.mxu0 0.0
    %169 = vmatprep.subr.mxu0 0.0
    %170 = vmatpush1.msra.mxu0 0.0
    %171 = vmatprep.subr.mxu0 0.0
    %172 = vmatpush1.msra.mxu0 %v140
    %173 = vmatprep.subr.mxu0 0.0
    %174 = vmatpush1.msra.mxu0 %v139
    %175 = vmatprep.subr.mxu0 0.0
    %176 = vmatpush1.msra.mxu0 %v138
    %177 = vmatprep.subr.mxu0 0.0
    %178 = vmatpush1.msra.mxu0 %v137
    %179 = vmatprep.subr.mxu0 0.0
    %180 = vmatpush2.msra.mxu0 0.0
    %181 = vmatprep.subr.mxu0 0.0
    %182 = vmatpush2.msra.mxu0 0.0
    %183 = vmatprep.subr.mxu0 0.0
    %184 = vmatpush2.msra.mxu0 0.0
    %185 = vmatprep.subr.mxu0 0.0
    %186 = vmatpush2.msra.mxu0 0.0
    %187 = vmatprep.subr.mxu0 0.0
    %188 = vmatpush2.msra.mxu0 0.0
    %189 = vmatprep.subr.mxu0 0.0
    %190 = vmatpush2.msra.mxu0 0.0
    %191 = vmatprep.subr.mxu0 0.0
    %192 = vmatpush2.msra.mxu0 0.0
    %193 = vmatprep.subr.mxu0 0.0
    %194 = vmatpush2.msra.mxu0 0.0
    %195 = vmatprep.subr.mxu0 0.0
    %196 = vmatpush2.msra.mxu0 0.0
    %197 = vmatprep.subr.mxu0 0.0
    %198 = vmatpush2.msra.mxu0 0.0
    %199 = vmatprep.subr.mxu0 0.0
    %200 = vmatpush2.msra.mxu0 0.0
    %201 = vmatprep.subr.mxu0 0.0
    %202 = vmatpush2.msra.mxu0 0.0
    %203 = vmatprep.subr.mxu0 0.0
    %204 = vmatpush2.msra.mxu0 0.0
    %205 = vmatprep.subr.mxu0 0.0
    %206 = vmatpush2.msra.mxu0 0.0
    %207 = vmatprep.subr.mxu0 0.0
    %208 = vmatpush2.msra.mxu0 0.0
    %209 = vmatprep.subr.mxu0 0.0
    %210 = vmatpush2.msra.mxu0 0.0
    %211 = vmatprep.mubr.f32.mxu0 0.0
    %212 = vmatmul.mubr.f32.gmra.mxu0 %v145
    %v213 = vpop.f32.mrf.mxu0
    %v214 = vadd.f32 0.0, %v213
    %v215 = vpop.f32.mrf.mxu0
    %216 = vdwg.mxu0
    %v218 = vrot.slane %v214, 1
    %v221 = vadd.f32 %v129, %v214
    %v222 = vadd.f32 %v134, %v218
    %v223 = vxor.u32 %v221, 2147483648
    %v224 = vxor.u32 %v222, 2147483648
    %v225 = vmul.f32 %v223, 1.442695
    %v226 = vpow.pop %v225
    %v227 = vmul.f32 %v224, 1.442695
    %v228 = vpow.pop %v227
    %v229 = vadd.f32 %v226, 1.0
    %v230 = vadd.f32 %v228, 1.0
    %v231 = vrcp.pop %v229
    %v232 = vmul.f32 1.0, %v231
    %v233 = vrcp.pop %v230
    %v234 = vmul.f32 1.0, %v233
    %v235 = vtanh.pop %v221
    %v236 = vtanh.pop %v222
    %v238 = vrot.slane %v142, 1
    %239 = vrot.lane.b32.xlu0 %v142, 32
    %v240 = vpop.permute.xlu0 %239
    %241 = vrot.lane.b32.xlu0 %v238, 32
    %v242 = vpop.permute.xlu0 %241
    %v245 = vmul.f32 %v232, %v240
    %v246 = vmul.f32 %v234, %v242
    %249 = vrot.lane.b32.xlu0 %v235, 64
    %v250 = vpop.permute.xlu0 %249
    %251 = vrot.lane.b32.xlu0 %v236, 64
    %v252 = vpop.permute.xlu0 %251
    %v255 = vmul.f32 %v232, %v250
    %v256 = vmul.f32 %v234, %v252
    %259 = vrot.lane.b32.xlu0 %v255, 32
    %v260 = vpop.permute.xlu0 %259
    %261 = vrot.lane.b32.xlu0 %v256, 32
    %v262 = vpop.permute.xlu0 %261
    %v265 = vadd.f32 %v245, %v260
    %v266 = vadd.f32 %v246, %v262
    %v267 = vtanh.pop %v265
    %v268 = vtanh.pop %v266
    %271 = vrot.lane.b32.xlu0 %v267, 64
    %v272 = vpop.permute.xlu0 %271
    %273 = vrot.lane.b32.xlu0 %v268, 64
    %v274 = vpop.permute.xlu0 %273
    %v277 = vmul.f32 %v232, %v272
    %v278 = vmul.f32 %v234, %v274
    %v281 = vrot.slane %v278, 7
    %vm282 = vcmask 1041409
    %v283 = vsel %vm282, %v281, %v277
    %284 = vrot.lane.b32.xlu0 %v283, 32
    %v285 = vpop.permute.xlu0 %284
    %v286 = vsel %vm143, %v285, 0
    %288 = vmatprep.subr.mxu0 0.0
    %289 = vmatpush1.msra.mxu0 0.0
    %290 = vmatprep.subr.mxu0 0.0
    %291 = vmatpush1.msra.mxu0 0.0
    %292 = vmatprep.subr.mxu0 0.0
    %293 = vmatpush1.msra.mxu0 0.0
    %294 = vmatprep.subr.mxu0 0.0
    %295 = vmatpush1.msra.mxu0 0.0
    %296 = vmatprep.subr.mxu0 0.0
    %297 = vmatpush1.msra.mxu0 0.0
    %298 = vmatprep.subr.mxu0 0.0
    %299 = vmatpush1.msra.mxu0 0.0
    %300 = vmatprep.subr.mxu0 0.0
    %301 = vmatpush1.msra.mxu0 0.0
    %302 = vmatprep.subr.mxu0 0.0
    %303 = vmatpush1.msra.mxu0 0.0
    %304 = vmatprep.subr.mxu0 0.0
    %305 = vmatpush1.msra.mxu0 0.0
    %306 = vmatprep.subr.mxu0 0.0
    %307 = vmatpush1.msra.mxu0 0.0
    %308 = vmatprep.subr.mxu0 0.0
    %309 = vmatpush1.msra.mxu0 0.0
    %310 = vmatprep.subr.mxu0 0.0
    %311 = vmatpush1.msra.mxu0 0.0
    %312 = vmatprep.subr.mxu0 0.0
    %313 = vmatpush1.msra.mxu0 %v140
    %314 = vmatprep.subr.mxu0 0.0
    %315 = vmatpush1.msra.mxu0 %v139
    %316 = vmatprep.subr.mxu0 0.0
    %317 = vmatpush1.msra.mxu0 %v138
    %318 = vmatprep.subr.mxu0 0.0
    %319 = vmatpush1.msra.mxu0 %v137
    %320 = vmatprep.subr.mxu0 0.0
    %321 = vmatpush2.msra.mxu0 0.0
    %322 = vmatprep.subr.mxu0 0.0
    %323 = vmatpush2.msra.mxu0 0.0
    %324 = vmatprep.subr.mxu0 0.0
    %325 = vmatpush2.msra.mxu0 0.0
    %326 = vmatprep.subr.mxu0 0.0
    %327 = vmatpush2.msra.mxu0 0.0
    %328 = vmatprep.subr.mxu0 0.0
    %329 = vmatpush2.msra.mxu0 0.0
    %330 = vmatprep.subr.mxu0 0.0
    %331 = vmatpush2.msra.mxu0 0.0
    %332 = vmatprep.subr.mxu0 0.0
    %333 = vmatpush2.msra.mxu0 0.0
    %334 = vmatprep.subr.mxu0 0.0
    %335 = vmatpush2.msra.mxu0 0.0
    %336 = vmatprep.subr.mxu0 0.0
    %337 = vmatpush2.msra.mxu0 0.0
    %338 = vmatprep.subr.mxu0 0.0
    %339 = vmatpush2.msra.mxu0 0.0
    %340 = vmatprep.subr.mxu0 0.0
    %341 = vmatpush2.msra.mxu0 0.0
    %342 = vmatprep.subr.mxu0 0.0
    %343 = vmatpush2.msra.mxu0 0.0
    %344 = vmatprep.subr.mxu0 0.0
    %345 = vmatpush2.msra.mxu0 0.0
    %346 = vmatprep.subr.mxu0 0.0
    %347 = vmatpush2.msra.mxu0 0.0
    %348 = vmatprep.subr.mxu0 0.0
    %349 = vmatpush2.msra.mxu0 0.0
    %350 = vmatprep.subr.mxu0 0.0
    %351 = vmatpush2.msra.mxu0 0.0
    %352 = vmatprep.mubr.f32.mxu0 0.0
    %353 = vmatmul.mubr.f32.gmra.mxu0 %v286
    %v354 = vpop.f32.mrf.mxu0
    %v355 = vadd.f32 0.0, %v354
    %v356 = vpop.f32.mrf.mxu0
    %357 = vdwg.mxu0
    %v359 = vrot.slane %v355, 7
    %v362 = vadd.f32 %v129, %v359
    %v363 = vadd.f32 %v134, %v355
    %v364 = vxor.u32 %v362, 2147483648
    %v365 = vxor.u32 %v363, 2147483648
    %v366 = vmul.f32 %v364, 1.442695
    %v367 = vpow.pop %v366
    %v368 = vmul.f32 %v365, 1.442695
    %v369 = vpow.pop %v368
    %v370 = vadd.f32 %v367, 1.0
    %v371 = vadd.f32 %v369, 1.0
    %v372 = vrcp.pop %v370
    %v373 = vmul.f32 1.0, %v372
    %v374 = vrcp.pop %v371
    %v375 = vmul.f32 1.0, %v374
    %v376 = vtanh.pop %v362
    %v377 = vtanh.pop %v363
    %v380 = vrot.slane %v265, 7
    %v381 = vrot.slane %v266, 7
    %v384 = vmul.f32 %v373, %v380
    %v385 = vmul.f32 %v375, %v381
    %388 = vrot.lane.b32.xlu0 %v376, 64
    %v389 = vpop.permute.xlu0 %388
    %390 = vrot.lane.b32.xlu0 %v377, 64
    %v391 = vpop.permute.xlu0 %390
    %v394 = vmul.f32 %v373, %v389
    %v395 = vmul.f32 %v375, %v391
    %398 = vrot.lane.b32.xlu0 %v394, 32
    %v399 = vpop.permute.xlu0 %398
    %400 = vrot.lane.b32.xlu0 %v395, 32
    %v401 = vpop.permute.xlu0 %400
    %v404 = vadd.f32 %v384, %v399
    %v405 = vadd.f32 %v385, %v401
    %v406 = vtanh.pop %v404
    %v407 = vtanh.pop %v405
    %410 = vrot.lane.b32.xlu0 %v406, 64
    %v411 = vpop.permute.xlu0 %410
    %412 = vrot.lane.b32.xlu0 %v407, 64
    %v413 = vpop.permute.xlu0 %412
    %v416 = vmul.f32 %v373, %v411
    %v417 = vmul.f32 %v375, %v413
    %v420 = vrot.slane %v416, 1
    %v421 = vsel %vm282, %v417, %v420
    %422 = vrot.lane.b32.xlu0 %v421, 32
    %v423 = vpop.permute.xlu0 %422
    %v424 = vsel %vm143, %v423, 0
    %426 = vmatprep.subr.mxu0 0.0
    %427 = vmatpush1.msra.mxu0 0.0
    %428 = vmatprep.subr.mxu0 0.0
    %429 = vmatpush1.msra.mxu0 0.0
    %430 = vmatprep.subr.mxu0 0.0
    %431 = vmatpush1.msra.mxu0 0.0
    %432 = vmatprep.subr.mxu0 0.0
    %433 = vmatpush1.msra.mxu0 0.0
    %434 = vmatprep.subr.mxu0 0.0
    %435 = vmatpush1.msra.mxu0 0.0
    %436 = vmatprep.subr.mxu0 0.0
    %437 = vmatpush1.msra.mxu0 0.0
    %438 = vmatprep.subr.mxu0 0.0
    %439 = vmatpush1.msra.mxu0 0.0
    %440 = vmatprep.subr.mxu0 0.0
    %441 = vmatpush1.msra.mxu0 0.0
    %442 = vmatprep.subr.mxu0 0.0
    %443 = vmatpush1.msra.mxu0 0.0
    %444 = vmatprep.subr.mxu0 0.0
    %445 = vmatpush1.msra.mxu0 0.0
    %446 = vmatprep.subr.mxu0 0.0
    %447 = vmatpush1.msra.mxu0 0.0
    %448 = vmatprep.subr.mxu0 0.0
    %449 = vmatpush1.msra.mxu0 0.0
    %450 = vmatprep.subr.mxu0 0.0
    %451 = vmatpush1.msra.mxu0 %v140
    %452 = vmatprep.subr.mxu0 0.0
    %453 = vmatpush1.msra.mxu0 %v139
    %454 = vmatprep.subr.mxu0 0.0
    %455 = vmatpush1.msra.mxu0 %v138
    %456 = vmatprep.subr.mxu0 0.0
    %457 = vmatpush1.msra.mxu0 %v137
    %458 = vmatprep.subr.mxu0 0.0
    %459 = vmatpush2.msra.mxu0 0.0
    %460 = vmatprep.subr.mxu0 0.0
    %461 = vmatpush2.msra.mxu0 0.0
    %462 = vmatprep.subr.mxu0 0.0
    %463 = vmatpush2.msra.mxu0 0.0
    %464 = vmatprep.subr.mxu0 0.0
    %465 = vmatpush2.msra.mxu0 0.0
    %466 = vmatprep.subr.mxu0 0.0
    %467 = vmatpush2.msra.mxu0 0.0
    %468 = vmatprep.subr.mxu0 0.0
    %469 = vmatpush2.msra.mxu0 0.0
    %470 = vmatprep.subr.mxu0 0.0
    %471 = vmatpush2.msra.mxu0 0.0
    %472 = vmatprep.subr.mxu0 0.0
    %473 = vmatpush2.msra.mxu0 0.0
    %474 = vmatprep.subr.mxu0 0.0
    %475 = vmatpush2.msra.mxu0 0.0
    %476 = vmatprep.subr.mxu0 0.0
    %477 = vmatpush2.msra.mxu0 0.0
    %478 = vmatprep.subr.mxu0 0.0
    %479 = vmatpush2.msra.mxu0 0.0
    %480 = vmatprep.subr.mxu0 0.0
    %481 = vmatpush2.msra.mxu0 0.0
    %482 = vmatprep.subr.mxu0 0.0
    %483 = vmatpush2.msra.mxu0 0.0
    %484 = vmatprep.subr.mxu0 0.0
    %485 = vmatpush2.msra.mxu0 0.0
    %486 = vmatprep.subr.mxu0 0.0
    %487 = vmatpush2.msra.mxu0 0.0
    %488 = vmatprep.subr.mxu0 0.0
    %489 = vmatpush2.msra.mxu0 0.0
    %490 = vmatprep.mubr.f32.mxu0 0.0
    %491 = vmatmul.mubr.f32.gmra.mxu0 %v424
    %v492 = vpop.f32.mrf.mxu0
    %v493 = vadd.f32 0.0, %v492
    %v494 = vpop.f32.mrf.mxu0
    %495 = vdwg.mxu0
    %v497 = vrot.slane %v493, 6
    %v498 = vrot.slane %v493, 7
    %v501 = vadd.f32 %v129, %v497
    %v502 = vadd.f32 %v134, %v498
    %v503 = vxor.u32 %v501, 2147483648
    %v504 = vxor.u32 %v502, 2147483648
    %v505 = vmul.f32 %v503, 1.442695
    %v506 = vpow.pop %v505
    %v507 = vmul.f32 %v504, 1.442695
    %v508 = vpow.pop %v507
    %v509 = vadd.f32 %v506, 1.0
    %v510 = vadd.f32 %v508, 1.0
    %v511 = vrcp.pop %v509
    %v512 = vmul.f32 1.0, %v511
    %v513 = vrcp.pop %v510
    %v514 = vmul.f32 1.0, %v513
    %v515 = vtanh.pop %v501
    %v516 = vtanh.pop %v502
    %v519 = vrot.slane %v404, 7
    %v520 = vrot.slane %v405, 7
    %v523 = vmul.f32 %v512, %v519
    %v524 = vmul.f32 %v514, %v520
    %527 = vrot.lane.b32.xlu0 %v515, 64
    %v528 = vpop.permute.xlu0 %527
    %529 = vrot.lane.b32.xlu0 %v516, 64
    %v530 = vpop.permute.xlu0 %529
    %v533 = vmul.f32 %v512, %v528
    %v534 = vmul.f32 %v514, %v530
    %537 = vrot.lane.b32.xlu0 %v533, 32
    %v538 = vpop.permute.xlu0 %537
    %539 = vrot.lane.b32.xlu0 %v534, 32
    %v540 = vpop.permute.xlu0 %539
    %v543 = vadd.f32 %v523, %v538
    %v544 = vadd.f32 %v524, %v540
    %v545 = vtanh.pop %v543
    %v546 = vtanh.pop %v544
    %549 = vrot.lane.b32.xlu0 %v545, 64
    %v550 = vpop.permute.xlu0 %549
    %551 = vrot.lane.b32.xlu0 %v546, 64
    %v552 = vpop.permute.xlu0 %551
    %v555 = vmul.f32 %v512, %v550
    %v556 = vmul.f32 %v514, %v552
    %v559 = vrot.slane %v555, 2
    %v560 = vrot.slane %v556, 1
    %v561 = vsel %vm282, %v560, %v559
    %562 = vrot.lane.b32.xlu0 %v561, 32
    %v563 = vpop.permute.xlu0 %562
    %v564 = vsel %vm143, %v563, 0
    %566 = vmatprep.subr.mxu0 0.0
    %567 = vmatpush1.msra.mxu0 0.0
    %568 = vmatprep.subr.mxu0 0.0
    %569 = vmatpush1.msra.mxu0 0.0
    %570 = vmatprep.subr.mxu0 0.0
    %571 = vmatpush1.msra.mxu0 0.0
    %572 = vmatprep.subr.mxu0 0.0
    %573 = vmatpush1.msra.mxu0 0.0
    %574 = vmatprep.subr.mxu0 0.0
    %575 = vmatpush1.msra.mxu0 0.0
    %576 = vmatprep.subr.mxu0 0.0
    %577 = vmatpush1.msra.mxu0 0.0
    %578 = vmatprep.subr.mxu0 0.0
    %579 = vmatpush1.msra.mxu0 0.0
    %580 = vmatprep.subr.mxu0 0.0
    %581 = vmatpush1.msra.mxu0 0.0
    %582 = vmatprep.subr.mxu0 0.0
    %583 = vmatpush1.msra.mxu0 0.0
    %584 = vmatprep.subr.mxu0 0.0
    %585 = vmatpush1.msra.mxu0 0.0
    %586 = vmatprep.subr.mxu0 0.0
    %587 = vmatpush1.msra.mxu0 0.0
    %588 = vmatprep.subr.mxu0 0.0
    %589 = vmatpush1.msra.mxu0 0.0
    %590 = vmatprep.subr.mxu0 0.0
    %591 = vmatpush1.msra.mxu0 %v140
    %592 = vmatprep.subr.mxu0 0.0
    %593 = vmatpush1.msra.mxu0 %v139
    %594 = vmatprep.subr.mxu0 0.0
    %595 = vmatpush1.msra.mxu0 %v138
    %596 = vmatprep.subr.mxu0 0.0
    %597 = vmatpush1.msra.mxu0 %v137
    %598 = vmatprep.subr.mxu0 0.0
    %599 = vmatpush2.msra.mxu0 0.0
    %600 = vmatprep.subr.mxu0 0.0
    %601 = vmatpush2.msra.mxu0 0.0
    %602 = vmatprep.subr.mxu0 0.0
    %603 = vmatpush2.msra.mxu0 0.0
    %604 = vmatprep.subr.mxu0 0.0
    %605 = vmatpush2.msra.mxu0 0.0
    %606 = vmatprep.subr.mxu0 0.0
    %607 = vmatpush2.msra.mxu0 0.0
    %608 = vmatprep.subr.mxu0 0.0
    %609 = vmatpush2.msra.mxu0 0.0
    %610 = vmatprep.subr.mxu0 0.0
    %611 = vmatpush2.msra.mxu0 0.0
    %612 = vmatprep.subr.mxu0 0.0
    %613 = vmatpush2.msra.mxu0 0.0
    %614 = vmatprep.subr.mxu0 0.0
    %615 = vmatpush2.msra.mxu0 0.0
    %616 = vmatprep.subr.mxu0 0.0
    %617 = vmatpush2.msra.mxu0 0.0
    %618 = vmatprep.subr.mxu0 0.0
    %619 = vmatpush2.msra.mxu0 0.0
    %620 = vmatprep.subr.mxu0 0.0
    %621 = vmatpush2.msra.mxu0 0.0
    %622 = vmatprep.subr.mxu0 0.0
    %623 = vmatpush2.msra.mxu0 0.0
    %624 = vmatprep.subr.mxu0 0.0
    %625 = vmatpush2.msra.mxu0 0.0
    %626 = vmatprep.subr.mxu0 0.0
    %627 = vmatpush2.msra.mxu0 0.0
    %628 = vmatprep.subr.mxu0 0.0
    %629 = vmatpush2.msra.mxu0 0.0
    %630 = vmatprep.mubr.f32.mxu0 0.0
    %631 = vmatmul.mubr.f32.gmra.mxu0 %v564
    %v632 = vpop.f32.mrf.mxu0
    %v633 = vadd.f32 0.0, %v632
    %v634 = vpop.f32.mrf.mxu0
    %635 = vdwg.mxu0
    %v637 = vrot.slane %v633, 5
    %v638 = vrot.slane %v633, 6
    %v641 = vadd.f32 %v129, %v637
    %v642 = vadd.f32 %v134, %v638
    %v643 = vxor.u32 %v641, 2147483648
    %v644 = vxor.u32 %v642, 2147483648
    %v645 = vmul.f32 %v643, 1.442695
    %v646 = vpow.pop %v645
    %v647 = vmul.f32 %v644, 1.442695
    %v648 = vpow.pop %v647
    %v649 = vadd.f32 %v646, 1.0
    %v650 = vadd.f32 %v648, 1.0
    %v651 = vrcp.pop %v649
    %v652 = vmul.f32 1.0, %v651
    %v653 = vrcp.pop %v650
    %v654 = vmul.f32 1.0, %v653
    %v655 = vtanh.pop %v641
    %v656 = vtanh.pop %v642
    %v659 = vrot.slane %v543, 7
    %v660 = vrot.slane %v544, 7
    %v663 = vmul.f32 %v652, %v659
    %v664 = vmul.f32 %v654, %v660
    %667 = vrot.lane.b32.xlu0 %v655, 64
    %v668 = vpop.permute.xlu0 %667
    %669 = vrot.lane.b32.xlu0 %v656, 64
    %v670 = vpop.permute.xlu0 %669
    %v673 = vmul.f32 %v652, %v668
    %v674 = vmul.f32 %v654, %v670
    %677 = vrot.lane.b32.xlu0 %v673, 32
    %v678 = vpop.permute.xlu0 %677
    %679 = vrot.lane.b32.xlu0 %v674, 32
    %v680 = vpop.permute.xlu0 %679
    %v683 = vadd.f32 %v663, %v678
    %v684 = vadd.f32 %v664, %v680
    %v685 = vtanh.pop %v683
    %v686 = vtanh.pop %v684
    %689 = vrot.lane.b32.xlu0 %v685, 64
    %v690 = vpop.permute.xlu0 %689
    %691 = vrot.lane.b32.xlu0 %v686, 64
    %v692 = vpop.permute.xlu0 %691
    %v695 = vmul.f32 %v652, %v690
    %v696 = vmul.f32 %v654, %v692
    %v699 = vrot.slane %v695, 3
    %v700 = vrot.slane %v696, 2
    %v701 = vsel %vm282, %v700, %v699
    %702 = vrot.lane.b32.xlu0 %v701, 32
    %v703 = vpop.permute.xlu0 %702
    %v704 = vsel %vm143, %v703, 0
    %706 = vmatprep.subr.mxu0 0.0
    %707 = vmatpush1.msra.mxu0 0.0
    %708 = vmatprep.subr.mxu0 0.0
    %709 = vmatpush1.msra.mxu0 0.0
    %710 = vmatprep.subr.mxu0 0.0
    %711 = vmatpush1.msra.mxu0 0.0
    %712 = vmatprep.subr.mxu0 0.0
    %713 = vmatpush1.msra.mxu0 0.0
    %714 = vmatprep.subr.mxu0 0.0
    %715 = vmatpush1.msra.mxu0 0.0
    %716 = vmatprep.subr.mxu0 0.0
    %717 = vmatpush1.msra.mxu0 0.0
    %718 = vmatprep.subr.mxu0 0.0
    %719 = vmatpush1.msra.mxu0 0.0
    %720 = vmatprep.subr.mxu0 0.0
    %721 = vmatpush1.msra.mxu0 0.0
    %722 = vmatprep.subr.mxu0 0.0
    %723 = vmatpush1.msra.mxu0 0.0
    %724 = vmatprep.subr.mxu0 0.0
    %725 = vmatpush1.msra.mxu0 0.0
    %726 = vmatprep.subr.mxu0 0.0
    %727 = vmatpush1.msra.mxu0 0.0
    %728 = vmatprep.subr.mxu0 0.0
    %729 = vmatpush1.msra.mxu0 0.0
    %730 = vmatprep.subr.mxu0 0.0
    %731 = vmatpush1.msra.mxu0 %v140
    %732 = vmatprep.subr.mxu0 0.0
    %733 = vmatpush1.msra.mxu0 %v139
    %734 = vmatprep.subr.mxu0 0.0
    %735 = vmatpush1.msra.mxu0 %v138
    %736 = vmatprep.subr.mxu0 0.0
    %737 = vmatpush1.msra.mxu0 %v137
    %738 = vmatprep.subr.mxu0 0.0
    %739 = vmatpush2.msra.mxu0 0.0
    %740 = vmatprep.subr.mxu0 0.0
    %741 = vmatpush2.msra.mxu0 0.0
    %742 = vmatprep.subr.mxu0 0.0
    %743 = vmatpush2.msra.mxu0 0.0
    %744 = vmatprep.subr.mxu0 0.0
    %745 = vmatpush2.msra.mxu0 0.0
    %746 = vmatprep.subr.mxu0 0.0
    %747 = vmatpush2.msra.mxu0 0.0
    %748 = vmatprep.subr.mxu0 0.0
    %749 = vmatpush2.msra.mxu0 0.0
    %750 = vmatprep.subr.mxu0 0.0
    %751 = vmatpush2.msra.mxu0 0.0
    %752 = vmatprep.subr.mxu0 0.0
    %753 = vmatpush2.msra.mxu0 0.0
    %754 = vmatprep.subr.mxu0 0.0
    %755 = vmatpush2.msra.mxu0 0.0
    %756 = vmatprep.subr.mxu0 0.0
    %757 = vmatpush2.msra.mxu0 0.0
    %758 = vmatprep.subr.mxu0 0.0
    %759 = vmatpush2.msra.mxu0 0.0
    %760 = vmatprep.subr.mxu0 0.0
    %761 = vmatpush2.msra.mxu0 0.0
    %762 = vmatprep.subr.mxu0 0.0
    %763 = vmatpush2.msra.mxu0 0.0
    %764 = vmatprep.subr.mxu0 0.0
    %765 = vmatpush2.msra.mxu0 0.0
    %766 = vmatprep.subr.mxu0 0.0
    %767 = vmatpush2.msra.mxu0 0.0
    %768 = vmatprep.subr.mxu0 0.0
    %769 = vmatpush2.msra.mxu0 0.0
    %770 = vmatprep.mubr.f32.mxu0 0.0
    %771 = vmatmul.mubr.f32.gmra.mxu0 %v704
    %v772 = vpop.f32.mrf.mxu0
    %v773 = vadd.f32 0.0, %v772
    %v774 = vpop.f32.mrf.mxu0
    %775 = vdwg.mxu0
    %v777 = vrot.slane %v773, 4
    %v778 = vrot.slane %v773, 5
    %v781 = vadd.f32 %v129, %v777
    %v782 = vadd.f32 %v134, %v778
    %v783 = vxor.u32 %v781, 2147483648
    %v784 = vxor.u32 %v782, 2147483648
    %v785 = vmul.f32 %v783, 1.442695
    %v786 = vpow.pop %v785
    %v787 = vmul.f32 %v784, 1.442695
    %v788 = vpow.pop %v787
    %v789 = vadd.f32 %v786, 1.0
    %v790 = vadd.f32 %v788, 1.0
    %v791 = vrcp.pop %v789
    %v792 = vmul.f32 1.0, %v791
    %v793 = vrcp.pop %v790
    %v794 = vmul.f32 1.0, %v793
    %v795 = vtanh.pop %v781
    %v796 = vtanh.pop %v782
    %v799 = vrot.slane %v683, 7
    %v800 = vrot.slane %v684, 7
    %v803 = vmul.f32 %v792, %v799
    %v804 = vmul.f32 %v794, %v800
    %807 = vrot.lane.b32.xlu0 %v795, 64
    %v808 = vpop.permute.xlu0 %807
    %809 = vrot.lane.b32.xlu0 %v796, 64
    %v810 = vpop.permute.xlu0 %809
    %v813 = vmul.f32 %v792, %v808
    %v814 = vmul.f32 %v794, %v810
    %817 = vrot.lane.b32.xlu0 %v813, 32
    %v818 = vpop.permute.xlu0 %817
    %819 = vrot.lane.b32.xlu0 %v814, 32
    %v820 = vpop.permute.xlu0 %819
    %v823 = vadd.f32 %v803, %v818
    %v824 = vadd.f32 %v804, %v820
    %v825 = vtanh.pop %v823
    %v826 = vtanh.pop %v824
    %829 = vrot.lane.b32.xlu0 %v825, 64
    %v830 = vpop.permute.xlu0 %829
    %831 = vrot.lane.b32.xlu0 %v826, 64
    %v832 = vpop.permute.xlu0 %831
    %v835 = vmul.f32 %v792, %v830
    %v836 = vmul.f32 %v794, %v832
    %v839 = vrot.slane %v835, 4
    %v840 = vrot.slane %v836, 3
    %v841 = vsel %vm282, %v840, %v839
    %842 = vrot.lane.b32.xlu0 %v841, 32
    %v843 = vpop.permute.xlu0 %842
    %v844 = vsel %vm143, %v843, 0
    %846 = vmatprep.subr.mxu0 0.0
    %847 = vmatpush1.msra.mxu0 0.0
    %848 = vmatprep.subr.mxu0 0.0
    %849 = vmatpush1.msra.mxu0 0.0
    %850 = vmatprep.subr.mxu0 0.0
    %851 = vmatpush1.msra.mxu0 0.0
    %852 = vmatprep.subr.mxu0 0.0
    %853 = vmatpush1.msra.mxu0 0.0
    %854 = vmatprep.subr.mxu0 0.0
    %855 = vmatpush1.msra.mxu0 0.0
    %856 = vmatprep.subr.mxu0 0.0
    %857 = vmatpush1.msra.mxu0 0.0
    %858 = vmatprep.subr.mxu0 0.0
    %859 = vmatpush1.msra.mxu0 0.0
    %860 = vmatprep.subr.mxu0 0.0
    %861 = vmatpush1.msra.mxu0 0.0
    %862 = vmatprep.subr.mxu0 0.0
    %863 = vmatpush1.msra.mxu0 0.0
    %864 = vmatprep.subr.mxu0 0.0
    %865 = vmatpush1.msra.mxu0 0.0
    %866 = vmatprep.subr.mxu0 0.0
    %867 = vmatpush1.msra.mxu0 0.0
    %868 = vmatprep.subr.mxu0 0.0
    %869 = vmatpush1.msra.mxu0 0.0
    %870 = vmatprep.subr.mxu0 0.0
    %871 = vmatpush1.msra.mxu0 %v140
    %872 = vmatprep.subr.mxu0 0.0
    %873 = vmatpush1.msra.mxu0 %v139
    %874 = vmatprep.subr.mxu0 0.0
    %875 = vmatpush1.msra.mxu0 %v138
    %876 = vmatprep.subr.mxu0 0.0
    %877 = vmatpush1.msra.mxu0 %v137
    %878 = vmatprep.subr.mxu0 0.0
    %879 = vmatpush2.msra.mxu0 0.0
    %880 = vmatprep.subr.mxu0 0.0
    %881 = vmatpush2.msra.mxu0 0.0
    %882 = vmatprep.subr.mxu0 0.0
    %883 = vmatpush2.msra.mxu0 0.0
    %884 = vmatprep.subr.mxu0 0.0
    %885 = vmatpush2.msra.mxu0 0.0
    %886 = vmatprep.subr.mxu0 0.0
    %887 = vmatpush2.msra.mxu0 0.0
    %888 = vmatprep.subr.mxu0 0.0
    %889 = vmatpush2.msra.mxu0 0.0
    %890 = vmatprep.subr.mxu0 0.0
    %891 = vmatpush2.msra.mxu0 0.0
    %892 = vmatprep.subr.mxu0 0.0
    %893 = vmatpush2.msra.mxu0 0.0
    %894 = vmatprep.subr.mxu0 0.0
    %895 = vmatpush2.msra.mxu0 0.0
    %896 = vmatprep.subr.mxu0 0.0
    %897 = vmatpush2.msra.mxu0 0.0
    %898 = vmatprep.subr.mxu0 0.0
    %899 = vmatpush2.msra.mxu0 0.0
    %900 = vmatprep.subr.mxu0 0.0
    %901 = vmatpush2.msra.mxu0 0.0
    %902 = vmatprep.subr.mxu0 0.0
    %903 = vmatpush2.msra.mxu0 0.0
    %904 = vmatprep.subr.mxu0 0.0
    %905 = vmatpush2.msra.mxu0 0.0
    %906 = vmatprep.subr.mxu0 0.0
    %907 = vmatpush2.msra.mxu0 0.0
    %908 = vmatprep.subr.mxu0 0.0
    %909 = vmatpush2.msra.mxu0 0.0
    %910 = vmatprep.mubr.f32.mxu0 0.0
    %911 = vmatmul.mubr.f32.gmra.mxu0 %v844
    %v912 = vpop.f32.mrf.mxu0
    %v913 = vadd.f32 0.0, %v912
    %v914 = vpop.f32.mrf.mxu0
    %915 = vdwg.mxu0
    %v917 = vrot.slane %v913, 3
    %v918 = vrot.slane %v913, 4
    %v921 = vadd.f32 %v129, %v917
    %v922 = vadd.f32 %v134, %v918
    %v923 = vxor.u32 %v921, 2147483648
    %v924 = vxor.u32 %v922, 2147483648
    %v925 = vmul.f32 %v923, 1.442695
    %v926 = vpow.pop %v925
    %v927 = vmul.f32 %v924, 1.442695
    %v928 = vpow.pop %v927
    %v929 = vadd.f32 %v926, 1.0
    %v930 = vadd.f32 %v928, 1.0
    %v931 = vrcp.pop %v929
    %v932 = vmul.f32 1.0, %v931
    %v933 = vrcp.pop %v930
    %v934 = vmul.f32 1.0, %v933
    %v935 = vtanh.pop %v921
    %v936 = vtanh.pop %v922
    %v939 = vrot.slane %v823, 7
    %v940 = vrot.slane %v824, 7
    %v943 = vmul.f32 %v932, %v939
    %v944 = vmul.f32 %v934, %v940
    %947 = vrot.lane.b32.xlu0 %v935, 64
    %v948 = vpop.permute.xlu0 %947
    %949 = vrot.lane.b32.xlu0 %v936, 64
    %v950 = vpop.permute.xlu0 %949
    %v953 = vmul.f32 %v932, %v948
    %v954 = vmul.f32 %v934, %v950
    %957 = vrot.lane.b32.xlu0 %v953, 32
    %v958 = vpop.permute.xlu0 %957
    %959 = vrot.lane.b32.xlu0 %v954, 32
    %v960 = vpop.permute.xlu0 %959
    %v963 = vadd.f32 %v943, %v958
    %v964 = vadd.f32 %v944, %v960
    %v965 = vtanh.pop %v963
    %v966 = vtanh.pop %v964
    %969 = vrot.lane.b32.xlu0 %v965, 64
    %v970 = vpop.permute.xlu0 %969
    %971 = vrot.lane.b32.xlu0 %v966, 64
    %v972 = vpop.permute.xlu0 %971
    %v975 = vmul.f32 %v932, %v970
    %v976 = vmul.f32 %v934, %v972
    %v979 = vrot.slane %v975, 5
    %v980 = vrot.slane %v976, 4
    %v981 = vsel %vm282, %v980, %v979
    %982 = vrot.lane.b32.xlu0 %v981, 32
    %v983 = vpop.permute.xlu0 %982
    %v984 = vsel %vm143, %v983, 0
    %986 = vmatprep.subr.mxu0 0.0
    %987 = vmatpush1.msra.mxu0 0.0
    %988 = vmatprep.subr.mxu0 0.0
    %989 = vmatpush1.msra.mxu0 0.0
    %990 = vmatprep.subr.mxu0 0.0
    %991 = vmatpush1.msra.mxu0 0.0
    %992 = vmatprep.subr.mxu0 0.0
    %993 = vmatpush1.msra.mxu0 0.0
    %994 = vmatprep.subr.mxu0 0.0
    %995 = vmatpush1.msra.mxu0 0.0
    %996 = vmatprep.subr.mxu0 0.0
    %997 = vmatpush1.msra.mxu0 0.0
    %998 = vmatprep.subr.mxu0 0.0
    %999 = vmatpush1.msra.mxu0 0.0
    %1000 = vmatprep.subr.mxu0 0.0
    %1001 = vmatpush1.msra.mxu0 0.0
    %1002 = vmatprep.subr.mxu0 0.0
    %1003 = vmatpush1.msra.mxu0 0.0
    %1004 = vmatprep.subr.mxu0 0.0
    %1005 = vmatpush1.msra.mxu0 0.0
    %1006 = vmatprep.subr.mxu0 0.0
    %1007 = vmatpush1.msra.mxu0 0.0
    %1008 = vmatprep.subr.mxu0 0.0
    %1009 = vmatpush1.msra.mxu0 0.0
    %1010 = vmatprep.subr.mxu0 0.0
    %1011 = vmatpush1.msra.mxu0 %v140
    %1012 = vmatprep.subr.mxu0 0.0
    %1013 = vmatpush1.msra.mxu0 %v139
    %1014 = vmatprep.subr.mxu0 0.0
    %1015 = vmatpush1.msra.mxu0 %v138
    %1016 = vmatprep.subr.mxu0 0.0
    %1017 = vmatpush1.msra.mxu0 %v137
    %1018 = vmatprep.subr.mxu0 0.0
    %1019 = vmatpush2.msra.mxu0 0.0
    %1020 = vmatprep.subr.mxu0 0.0
    %1021 = vmatpush2.msra.mxu0 0.0
    %1022 = vmatprep.subr.mxu0 0.0
    %1023 = vmatpush2.msra.mxu0 0.0
    %1024 = vmatprep.subr.mxu0 0.0
    %1025 = vmatpush2.msra.mxu0 0.0
    %1026 = vmatprep.subr.mxu0 0.0
    %1027 = vmatpush2.msra.mxu0 0.0
    %1028 = vmatprep.subr.mxu0 0.0
    %1029 = vmatpush2.msra.mxu0 0.0
    %1030 = vmatprep.subr.mxu0 0.0
    %1031 = vmatpush2.msra.mxu0 0.0
    %1032 = vmatprep.subr.mxu0 0.0
    %1033 = vmatpush2.msra.mxu0 0.0
    %1034 = vmatprep.subr.mxu0 0.0
    %1035 = vmatpush2.msra.mxu0 0.0
    %1036 = vmatprep.subr.mxu0 0.0
    %1037 = vmatpush2.msra.mxu0 0.0
    %1038 = vmatprep.subr.mxu0 0.0
    %1039 = vmatpush2.msra.mxu0 0.0
    %1040 = vmatprep.subr.mxu0 0.0
    %1041 = vmatpush2.msra.mxu0 0.0
    %1042 = vmatprep.subr.mxu0 0.0
    %1043 = vmatpush2.msra.mxu0 0.0
    %1044 = vmatprep.subr.mxu0 0.0
    %1045 = vmatpush2.msra.mxu0 0.0
    %1046 = vmatprep.subr.mxu0 0.0
    %1047 = vmatpush2.msra.mxu0 0.0
    %1048 = vmatprep.subr.mxu0 0.0
    %1049 = vmatpush2.msra.mxu0 0.0
    %1050 = vmatprep.mubr.f32.mxu0 0.0
    %1051 = vmatmul.mubr.f32.gmra.mxu0 %v984
    %v1052 = vpop.f32.mrf.mxu0
    %v1053 = vadd.f32 0.0, %v1052
    %v1054 = vpop.f32.mrf.mxu0
    %1055 = vdwg.mxu0
    %v1057 = vrot.slane %v1053, 2
    %v1058 = vrot.slane %v1053, 3
    %v1061 = vadd.f32 %v129, %v1057
    %v1062 = vadd.f32 %v134, %v1058
    %v1063 = vxor.u32 %v1061, 2147483648
    %v1064 = vxor.u32 %v1062, 2147483648
    %v1065 = vmul.f32 %v1063, 1.442695
    %v1066 = vpow.pop %v1065
    %v1067 = vmul.f32 %v1064, 1.442695
    %v1068 = vpow.pop %v1067
    %v1069 = vadd.f32 %v1066, 1.0
    %v1070 = vadd.f32 %v1068, 1.0
    %v1071 = vrcp.pop %v1069
    %v1072 = vmul.f32 1.0, %v1071
    %v1073 = vrcp.pop %v1070
    %v1074 = vmul.f32 1.0, %v1073
    %v1075 = vtanh.pop %v1061
    %v1076 = vtanh.pop %v1062
    %v1079 = vrot.slane %v963, 7
    %v1080 = vrot.slane %v964, 7
    %v1083 = vmul.f32 %v1072, %v1079
    %v1084 = vmul.f32 %v1074, %v1080
    %1087 = vrot.lane.b32.xlu0 %v1075, 64
    %v1088 = vpop.permute.xlu0 %1087
    %1089 = vrot.lane.b32.xlu0 %v1076, 64
    %v1090 = vpop.permute.xlu0 %1089
    %v1093 = vmul.f32 %v1072, %v1088
    %v1094 = vmul.f32 %v1074, %v1090
    %1097 = vrot.lane.b32.xlu0 %v1093, 32
    %v1098 = vpop.permute.xlu0 %1097
    %1099 = vrot.lane.b32.xlu0 %v1094, 32
    %v1100 = vpop.permute.xlu0 %1099
    %v1103 = vadd.f32 %v1083, %v1098
    %v1104 = vadd.f32 %v1084, %v1100
    %v1105 = vtanh.pop %v1103
    %v1106 = vtanh.pop %v1104
    %1109 = vrot.lane.b32.xlu0 %v1105, 64
    %v1110 = vpop.permute.xlu0 %1109
    %1111 = vrot.lane.b32.xlu0 %v1106, 64
    %v1112 = vpop.permute.xlu0 %1111
    %v1115 = vmul.f32 %v1072, %v1110
    %v1116 = vmul.f32 %v1074, %v1112
    %v1119 = vrot.slane %v1115, 6
    %v1120 = vrot.slane %v1116, 5
    %v1121 = vsel %vm282, %v1120, %v1119
    %1122 = vrot.lane.b32.xlu0 %v1121, 32
    %v1123 = vpop.permute.xlu0 %1122
    %v1124 = vsel %vm143, %v1123, 0
    %1126 = vmatprep.subr.mxu0 0.0
    %1127 = vmatpush1.msra.mxu0 0.0
    %1128 = vmatprep.subr.mxu0 0.0
    %1129 = vmatpush1.msra.mxu0 0.0
    %1130 = vmatprep.subr.mxu0 0.0
    %1131 = vmatpush1.msra.mxu0 0.0
    %1132 = vmatprep.subr.mxu0 0.0
    %1133 = vmatpush1.msra.mxu0 0.0
    %1134 = vmatprep.subr.mxu0 0.0
    %1135 = vmatpush1.msra.mxu0 0.0
    %1136 = vmatprep.subr.mxu0 0.0
    %1137 = vmatpush1.msra.mxu0 0.0
    %1138 = vmatprep.subr.mxu0 0.0
    %1139 = vmatpush1.msra.mxu0 0.0
    %1140 = vmatprep.subr.mxu0 0.0
    %1141 = vmatpush1.msra.mxu0 0.0
    %1142 = vmatprep.subr.mxu0 0.0
    %1143 = vmatpush1.msra.mxu0 0.0
    %1144 = vmatprep.subr.mxu0 0.0
    %1145 = vmatpush1.msra.mxu0 0.0
    %1146 = vmatprep.subr.mxu0 0.0
    %1147 = vmatpush1.msra.mxu0 0.0
    %1148 = vmatprep.subr.mxu0 0.0
    %1149 = vmatpush1.msra.mxu0 0.0
    %1150 = vmatprep.subr.mxu0 0.0
    %1151 = vmatpush1.msra.mxu0 %v140
    %1152 = vmatprep.subr.mxu0 0.0
    %1153 = vmatpush1.msra.mxu0 %v139
    %1154 = vmatprep.subr.mxu0 0.0
    %1155 = vmatpush1.msra.mxu0 %v138
    %1156 = vmatprep.subr.mxu0 0.0
    %1157 = vmatpush1.msra.mxu0 %v137
    %1158 = vmatprep.subr.mxu0 0.0
    %1159 = vmatpush2.msra.mxu0 0.0
    %1160 = vmatprep.subr.mxu0 0.0
    %1161 = vmatpush2.msra.mxu0 0.0
    %1162 = vmatprep.subr.mxu0 0.0
    %1163 = vmatpush2.msra.mxu0 0.0
    %1164 = vmatprep.subr.mxu0 0.0
    %1165 = vmatpush2.msra.mxu0 0.0
    %1166 = vmatprep.subr.mxu0 0.0
    %1167 = vmatpush2.msra.mxu0 0.0
    %1168 = vmatprep.subr.mxu0 0.0
    %1169 = vmatpush2.msra.mxu0 0.0
    %1170 = vmatprep.subr.mxu0 0.0
    %1171 = vmatpush2.msra.mxu0 0.0
    %1172 = vmatprep.subr.mxu0 0.0
    %1173 = vmatpush2.msra.mxu0 0.0
    %1174 = vmatprep.subr.mxu0 0.0
    %1175 = vmatpush2.msra.mxu0 0.0
    %1176 = vmatprep.subr.mxu0 0.0
    %1177 = vmatpush2.msra.mxu0 0.0
    %1178 = vmatprep.subr.mxu0 0.0
    %1179 = vmatpush2.msra.mxu0 0.0
    %1180 = vmatprep.subr.mxu0 0.0
    %1181 = vmatpush2.msra.mxu0 0.0
    %1182 = vmatprep.subr.mxu0 0.0
    %1183 = vmatpush2.msra.mxu0 0.0
    %1184 = vmatprep.subr.mxu0 0.0
    %1185 = vmatpush2.msra.mxu0 0.0
    %1186 = vmatprep.subr.mxu0 0.0
    %1187 = vmatpush2.msra.mxu0 0.0
    %1188 = vmatprep.subr.mxu0 0.0
    %1189 = vmatpush2.msra.mxu0 0.0
    %1190 = vmatprep.mubr.f32.mxu0 0.0
    %1191 = vmatmul.mubr.f32.gmra.mxu0 %v1124
    %v1192 = vpop.f32.mrf.mxu0
    %v1193 = vadd.f32 0.0, %v1192
    %v1194 = vpop.f32.mrf.mxu0
    %1195 = vdwg.mxu0
    %v1197 = vrot.slane %v1193, 1
    %v1198 = vrot.slane %v1193, 2
    %v1201 = vadd.f32 %v129, %v1197
    %v1202 = vadd.f32 %v134, %v1198
    %v1203 = vxor.u32 %v1201, 2147483648
    %v1204 = vxor.u32 %v1202, 2147483648
    %v1205 = vmul.f32 %v1203, 1.442695
    %v1206 = vpow.pop %v1205
    %v1207 = vmul.f32 %v1204, 1.442695
    %v1208 = vpow.pop %v1207
    %v1209 = vadd.f32 %v1206, 1.0
    %v1210 = vadd.f32 %v1208, 1.0
    %v1211 = vrcp.pop %v1209
    %v1212 = vmul.f32 1.0, %v1211
    %v1213 = vrcp.pop %v1210
    %v1214 = vmul.f32 1.0, %v1213
    %v1215 = vtanh.pop %v1201
    %v1216 = vtanh.pop %v1202
    %v1219 = vrot.slane %v1103, 7
    %v1220 = vrot.slane %v1104, 7
    %v1223 = vmul.f32 %v1212, %v1219
    %v1224 = vmul.f32 %v1214, %v1220
    %1227 = vrot.lane.b32.xlu0 %v1215, 64
    %v1228 = vpop.permute.xlu0 %1227
    %1229 = vrot.lane.b32.xlu0 %v1216, 64
    %v1230 = vpop.permute.xlu0 %1229
    %v1233 = vmul.f32 %v1212, %v1228
    %v1234 = vmul.f32 %v1214, %v1230
    %1237 = vrot.lane.b32.xlu0 %v1233, 32
    %v1238 = vpop.permute.xlu0 %1237
    %1239 = vrot.lane.b32.xlu0 %v1234, 32
    %v1240 = vpop.permute.xlu0 %1239
    %v1243 = vadd.f32 %v1223, %v1238
    %v1244 = vadd.f32 %v1224, %v1240
    %v1245 = vtanh.pop %v1243
    %v1246 = vtanh.pop %v1244
    %1249 = vrot.lane.b32.xlu0 %v1245, 64
    %v1250 = vpop.permute.xlu0 %1249
    %1251 = vrot.lane.b32.xlu0 %v1246, 64
    %v1252 = vpop.permute.xlu0 %1251
    %v1255 = vmul.f32 %v1212, %v1250
    %v1256 = vmul.f32 %v1214, %v1252
    %v1257 = vld [vmem:[%s6] sm:$0xff]
    %v1258 = vld [vmem:[%s6 + $0x8] sm:$0xff]
    %v1259 = vld [vmem:[%s6 + $0x10] sm:$0xff]
    %v1260 = vld [vmem:[%s6 + $0x18] sm:$0xff]
    %v1261 = vld [vmem:[%s7] sm:$0x1]
    %v1263 = vlaneseq
    %v1264 = vshrl.u32 %v1263, 7
    %v1265 = vsub.s32 0, %v1264
    %v1266 = vrot.slane %v1261, %v1265
    %v1270 = vrot.slane %v1255, 7
    %v1271 = vrot.slane %v1256, 6
    %v1272 = vsel %vm282, %v1271, %v1270
    %1273 = vrot.lane.b32.xlu0 %v1272, 32
    %v1274 = vpop.permute.xlu0 %1273
    %v1275 = vsel %vm143, %v1274, 0
    %1277 = vmatprep.subr.mxu0 0.0
    %1278 = vmatpush1.msra.mxu0 0.0
    %1279 = vmatprep.subr.mxu0 0.0
    %1280 = vmatpush1.msra.mxu0 0.0
    %1281 = vmatprep.subr.mxu0 0.0
    %1282 = vmatpush1.msra.mxu0 0.0
    %1283 = vmatprep.subr.mxu0 0.0
    %1284 = vmatpush1.msra.mxu0 0.0
    %1285 = vmatprep.subr.mxu0 0.0
    %1286 = vmatpush1.msra.mxu0 0.0
    %1287 = vmatprep.subr.mxu0 0.0
    %1288 = vmatpush1.msra.mxu0 0.0
    %1289 = vmatprep.subr.mxu0 0.0
    %1290 = vmatpush1.msra.mxu0 0.0
    %1291 = vmatprep.subr.mxu0 0.0
    %1292 = vmatpush1.msra.mxu0 0.0
    %1293 = vmatprep.subr.mxu0 0.0
    %1294 = vmatpush1.msra.mxu0 0.0
    %1295 = vmatprep.subr.mxu0 0.0
    %1296 = vmatpush1.msra.mxu0 0.0
    %1297 = vmatprep.subr.mxu0 0.0
    %1298 = vmatpush1.msra.mxu0 0.0
    %1299 = vmatprep.subr.mxu0 0.0
    %1300 = vmatpush1.msra.mxu0 0.0
    %1301 = vmatprep.subr.mxu0 0.0
    %1302 = vmatpush1.msra.mxu0 %v1260
    %1303 = vmatprep.subr.mxu0 0.0
    %1304 = vmatpush1.msra.mxu0 %v1259
    %1305 = vmatprep.subr.mxu0 0.0
    %1306 = vmatpush1.msra.mxu0 %v1258
    %1307 = vmatprep.subr.mxu0 0.0
    %1308 = vmatpush1.msra.mxu0 %v1257
    %1309 = vmatprep.subr.mxu0 0.0
    %1310 = vmatpush2.msra.mxu0 0.0
    %1311 = vmatprep.subr.mxu0 0.0
    %1312 = vmatpush2.msra.mxu0 0.0
    %1313 = vmatprep.subr.mxu0 0.0
    %1314 = vmatpush2.msra.mxu0 0.0
    %1315 = vmatprep.subr.mxu0 0.0
    %1316 = vmatpush2.msra.mxu0 0.0
    %1317 = vmatprep.subr.mxu0 0.0
    %1318 = vmatpush2.msra.mxu0 0.0
    %1319 = vmatprep.subr.mxu0 0.0
    %1320 = vmatpush2.msra.mxu0 0.0
    %1321 = vmatprep.subr.mxu0 0.0
    %1322 = vmatpush2.msra.mxu0 0.0
    %1323 = vmatprep.subr.mxu0 0.0
    %1324 = vmatpush2.msra.mxu0 0.0
    %1325 = vmatprep.subr.mxu0 0.0
    %1326 = vmatpush2.msra.mxu0 0.0
    %1327 = vmatprep.subr.mxu0 0.0
    %1328 = vmatpush2.msra.mxu0 0.0
    %1329 = vmatprep.subr.mxu0 0.0
    %1330 = vmatpush2.msra.mxu0 0.0
    %1331 = vmatprep.subr.mxu0 0.0
    %1332 = vmatpush2.msra.mxu0 0.0
    %1333 = vmatprep.subr.mxu0 0.0
    %1334 = vmatpush2.msra.mxu0 0.0
    %1335 = vmatprep.subr.mxu0 0.0
    %1336 = vmatpush2.msra.mxu0 0.0
    %1337 = vmatprep.subr.mxu0 0.0
    %1338 = vmatpush2.msra.mxu0 0.0
    %1339 = vmatprep.subr.mxu0 0.0
    %1340 = vmatpush2.msra.mxu0 0.0
    %1341 = vmatprep.mubr.f32.mxu0 0.0
    %1342 = vmatmul.mubr.f32.gmra.mxu0 %v1275
    %v1343 = vpop.f32.mrf.mxu0
    %v1344 = vadd.f32 %v1266, %v1343
    %v1345 = vpop.f32.mrf.mxu0
    %1346 = vdwg.mxu0
    %vm1347 = vcmask 123904
    %1348 = vst.msk [vmem:[#allocation5] sm:$0x3] %vm1347, %v1344
    // Predicated region
    $region38: #{tpu_custom_call.1} parent=1 // pred_check
      _
    $region39: #{tpu_custom_call.1} parent=1 // pred_check_branch
      %1350 = sbr.rel (0) target = $region41
    $region40: #{tpu_custom_call.1} parent=1 // pred_region
      %s1352 = ssub.s32 32, 32
      %1353 = vsyncadd [#allocation4], %s1352
      %s1355 = sshll.u32 [#allocation5], 4
      %s1356 = int_to_ptr.vmem [resolvable:$true] %s1355
      %1358 = dma.vmem_to_hbm [thread:$0]  %s1356, 32, %s8, [#allocation4]
    $region41: #{tpu_custom_call.1} parent=1 // pred_fallthru
      _
    // Predicated region
    $region42: #{tpu_custom_call.1} parent=1 // pred_check
      _
    $region43: #{tpu_custom_call.1} parent=1 // pred_check_branch
      %1360 = sbr.rel (0) target = $region45
    $region44: #{tpu_custom_call.1} parent=1 // pred_region
      %1361 = dma.done [#allocation4], 32
    $region45: #{tpu_custom_call.1} parent=1 // pred_fallthru
      _
    %1362 = vsyncpa [#allocation3], 1
    %1363 = vsyncpa [#allocation4], 1

</llo_original>
